<compile_context>
chip_gen: v5e
topology: v5e:2x2
jax: 0.10.0
libtpu: 0.0.40
codegen_flags: <defaults>
</compile_context>

<pallas_src>
import jax
import jax.numpy as jnp
from jax.experimental import pallas as pl
from jax.experimental.pallas import tpu as pltpu


def nn_policy_kernel(x_ref, w1_ref, b1_ref, dw_ref, db_ref, o_ref):
    # x_ref:  (BM, 4)   batch tile of observations
    # w1_ref: (4, H)    l1 weight (transposed vs PyTorch: [in, out])
    # b1_ref: (1, H)    l1 bias
    # dw_ref: (H, 1)    w2[:, 1] - w2[:, 0]   (logit-difference weights)
    # db_ref: (1, 1)    b2[1] - b2[0]
    # o_ref:  (BM, 2)   softmax action probabilities
    x = x_ref[...]
    w1 = w1_ref[...]

    # ---- layer 1 + ReLU: K=4 contraction as 4 VPU broadcast-FMAs (MXU would
    # be <2% utilized on the contraction dim).
    h = (x[:, 0:1] * w1[0:1, :]
         + x[:, 1:2] * w1[1:2, :]
         + x[:, 2:3] * w1[2:3, :]
         + x[:, 3:4] * w1[3:4, :]
         + b1_ref[...])
    h = jnp.maximum(h, 0.0)

    # ---- layer 2 reduced to the logit difference d = logit_1 - logit_0
    d = jnp.dot(h, dw_ref[...], preferred_element_type=jnp.float32) + db_ref[...]

    # softmax over 2 actions == [1 - sigmoid(d), sigmoid(d)]
    p1 = 1.0 / (1.0 + jnp.exp(-d))          # (BM, 1)
    p0 = 1.0 - p1

    o_ref[:, 0:1] = p0.astype(o_ref.dtype)
    o_ref[:, 1:2] = p1.astype(o_ref.dtype)


def _round_up(n, m):
    return ((n + m - 1) // m) * m


def _choose_block_m(batch):
    """Large tiles to amortize per-grid-step overhead.

    - Small batch: one block covering the whole (8-rounded) batch.
    - Large batch: >=4 parallel grid steps (keeps both v7x TensorCores busy),
      capped at 2048 rows/tile (f32 hidden activation = 512 B/row -> ~1 MiB,
      well inside VMEM on v5e/v6e/v7x).
    """
    if batch <= 1024:
        return _round_up(batch, 8)
    return min(2048, _round_up(pl.cdiv(batch, 4), 8))


def nn_policy_forward(x, w1, b1, w2, b2, *, block_m=None):
    """x: [B, 4] float32 -> action probabilities [B, 2] float32."""
    B, obs_dim = x.shape
    H = w1.shape[1]

    # Collapse the 2-action softmax: only the logit difference matters.
    dw = (w2[:, 1:2] - w2[:, 0:1]).astype(jnp.float32)   # (H, 1)
    db = (b2[:, 1:2] - b2[:, 0:1]).astype(jnp.float32)   # (1, 1)

    if block_m is None:
        block_m = _choose_block_m(B)
    block_m = max(8, _round_up(block_m, 8))

    # Pad the batch so the grid tiles it exactly; slice the pad rows off after.
    Bp = pl.cdiv(B, block_m) * block_m
    if Bp != B:
        x = jnp.pad(x, ((0, Bp - B), (0, 0)))
    grid = (Bp // block_m,)

    out = pl.pallas_call(
        nn_policy_kernel,
        out_shape=jax.ShapeDtypeStruct((Bp, 2), jnp.float32),
        grid_spec=pltpu.PrefetchScalarGridSpec(
            num_scalar_prefetch=0,
            grid=grid,
            in_specs=[
                pl.BlockSpec((block_m, obs_dim), lambda i: (i, 0)),  # x tile
                pl.BlockSpec((obs_dim, H), lambda i: (0, 0)),        # w1 (whole)
                pl.BlockSpec((1, H), lambda i: (0, 0)),              # b1
                pl.BlockSpec((H, 1), lambda i: (0, 0)),              # dw
                pl.BlockSpec((1, 1), lambda i: (0, 0)),              # db
            ],
            out_specs=pl.BlockSpec((block_m, 2), lambda i: (i, 0)),
        ),
        compiler_params=pltpu.CompilerParams(
            dimension_semantics=("parallel",),
        ),
    )(x, w1, b1, dw, db)

    return out[:B] if Bp != B else out


def init_params(key, num_hidden=128):
    """Deterministic synthetic parameters matching nn.Linear shapes.

    PyTorch stores Linear weights as [out, in]; we keep them transposed
    ([in, out]) so the math is x @ W + b (identical result).
    """
    k1, k2, k3, k4 = jax.random.split(key, 4)
    w1 = jax.random.uniform(k1, (4, num_hidden), jnp.float32, -0.5, 0.5)
    b1 = jax.random.uniform(k2, (1, num_hidden), jnp.float32, -0.5, 0.5)
    w2 = jax.random.uniform(k3, (num_hidden, 2), jnp.float32, -0.1, 0.1)
    b2 = jax.random.uniform(k4, (1, 2), jnp.float32, -0.1, 0.1)
    return w1, b1, w2, b2


def reference_forward(x, w1, b1, w2, b2):
    h = jnp.maximum(x @ w1 + b1, 0.0)
    logits = h @ w2 + b2
    return jax.nn.softmax(logits, axis=-1)


# TODO(synk): get_probs / sample_action (torch.multinomial) are host-side
# helpers on top of forward(); only the forward pass is implemented as a kernel.

if __name__ == "__main__":
    key = jax.random.PRNGKey(0)
    kx, kp = jax.random.split(key)

    num_hidden = 128
    batch = 16
    x = jax.random.normal(kx, (batch, 4), jnp.float32)
    w1, b1, w2, b2 = init_params(kp, num_hidden)

    probs = nn_policy_forward(x, w1, b1, w2, b2)
    probs = jax.block_until_ready(probs)

    ref = reference_forward(x, w1, b1, w2, b2)
    assert probs.shape == (batch, 2)
    assert jnp.allclose(probs, ref, atol=1e-5, rtol=1e-5)
    assert jnp.allclose(jnp.sum(probs, axis=-1), 1.0, atol=1e-5)

    # Also exercise the ragged-batch (padding) path.
    x_odd = jax.random.normal(jax.random.PRNGKey(1), (10, 4), jnp.float32)
    probs_odd = jax.block_until_ready(nn_policy_forward(x_odd, w1, b1, w2, b2))
    ref_odd = reference_forward(x_odd, w1, b1, w2, b2)
    assert probs_odd.shape == (10, 2)
    assert jnp.allclose(probs_odd, ref_odd, atol=1e-5, rtol=1e-5)

    print("KERNEL_OK")
</pallas_src>

<mosaic_0001>
module attributes {stable_mosaic.version = 11 : i64} {
  func.func @nn_policy_kernel(%arg0: i32, %arg1: memref<16x4xf32, #tpu.memory_space<vmem>>, %arg2: memref<4x128xf32, #tpu.memory_space<vmem>>, %arg3: memref<1x128xf32, #tpu.memory_space<vmem>>, %arg4: memref<128x1xf32, #tpu.memory_space<vmem>>, %arg5: memref<1x1xf32, #tpu.memory_space<vmem>>, %arg6: memref<16x2xf32, #tpu.memory_space<vmem>>) attributes {dimension_semantics = [#tpu.dimension_semantics<parallel>], iteration_bounds = array<i64: 1>, scalar_prefetch = 0 : i64, scratch_operands = 0 : i64, tpu.core_type = #tpu.core_type<tc>, window_params = [{transform_indices = @transform_0, window_bounds = array<i64: 16, 4>}, {pipeline_mode = #tpu.pipeline_mode<synchronous>, transform_indices = @transform_1, window_bounds = array<i64: 4, 128>}, {pipeline_mode = #tpu.pipeline_mode<synchronous>, transform_indices = @transform_2, window_bounds = array<i64: 1, 128>}, {pipeline_mode = #tpu.pipeline_mode<synchronous>, transform_indices = @transform_3, window_bounds = array<i64: 128, 1>}, {pipeline_mode = #tpu.pipeline_mode<synchronous>, transform_indices = @transform_4, window_bounds = array<i64: 1, 1>}, {transform_indices = @transform_5, window_bounds = array<i64: 16, 2>}]} {
    %c0 = arith.constant 0 : index
    %c0_0 = arith.constant 0 : index
    %0 = vector.load %arg1[%c0, %c0_0] : memref<16x4xf32, #tpu.memory_space<vmem>>, vector<16x4xf32>
    %c0_1 = arith.constant 0 : index
    %c0_2 = arith.constant 0 : index
    %1 = vector.load %arg2[%c0_1, %c0_2] : memref<4x128xf32, #tpu.memory_space<vmem>>, vector<4x128xf32>
    %2 = vector.extract_strided_slice %0 {offsets = [0, 0], sizes = [16, 1], strides = [1, 1]} : vector<16x4xf32> to vector<16x1xf32>
    %3 = vector.extract_strided_slice %1 {offsets = [0, 0], sizes = [1, 128], strides = [1, 1]} : vector<4x128xf32> to vector<1x128xf32>
    %4 = vector.broadcast %2 : vector<16x1xf32> to vector<16x128xf32>
    %5 = vector.broadcast %3 : vector<1x128xf32> to vector<16x128xf32>
    %6 = arith.mulf %4, %5 : vector<16x128xf32>
    %7 = vector.extract_strided_slice %0 {offsets = [0, 1], sizes = [16, 1], strides = [1, 1]} : vector<16x4xf32> to vector<16x1xf32>
    %8 = vector.extract_strided_slice %1 {offsets = [1, 0], sizes = [1, 128], strides = [1, 1]} : vector<4x128xf32> to vector<1x128xf32>
    %9 = vector.broadcast %7 : vector<16x1xf32> to vector<16x128xf32>
    %10 = vector.broadcast %8 : vector<1x128xf32> to vector<16x128xf32>
    %11 = arith.mulf %9, %10 : vector<16x128xf32>
    %12 = arith.addf %6, %11 : vector<16x128xf32>
    %13 = vector.extract_strided_slice %0 {offsets = [0, 2], sizes = [16, 1], strides = [1, 1]} : vector<16x4xf32> to vector<16x1xf32>
    %14 = vector.extract_strided_slice %1 {offsets = [2, 0], sizes = [1, 128], strides = [1, 1]} : vector<4x128xf32> to vector<1x128xf32>
    %15 = vector.broadcast %13 : vector<16x1xf32> to vector<16x128xf32>
    %16 = vector.broadcast %14 : vector<1x128xf32> to vector<16x128xf32>
    %17 = arith.mulf %15, %16 : vector<16x128xf32>
    %18 = arith.addf %12, %17 : vector<16x128xf32>
    %19 = vector.extract_strided_slice %0 {offsets = [0, 3], sizes = [16, 1], strides = [1, 1]} : vector<16x4xf32> to vector<16x1xf32>
    %20 = vector.extract_strided_slice %1 {offsets = [3, 0], sizes = [1, 128], strides = [1, 1]} : vector<4x128xf32> to vector<1x128xf32>
    %21 = vector.broadcast %19 : vector<16x1xf32> to vector<16x128xf32>
    %22 = vector.broadcast %20 : vector<1x128xf32> to vector<16x128xf32>
    %23 = arith.mulf %21, %22 : vector<16x128xf32>
    %24 = arith.addf %18, %23 : vector<16x128xf32>
    %c0_3 = arith.constant 0 : index
    %c0_4 = arith.constant 0 : index
    %25 = vector.load %arg3[%c0_3, %c0_4] : memref<1x128xf32, #tpu.memory_space<vmem>>, vector<1x128xf32>
    %26 = vector.broadcast %25 : vector<1x128xf32> to vector<16x128xf32>
    %27 = arith.addf %24, %26 : vector<16x128xf32>
    %cst = arith.constant 0.000000e+00 : f32
    %28 = vector.broadcast %cst : f32 to vector<16x128xf32>
    %29 = arith.maximumf %27, %28 : vector<16x128xf32>
    %c0_5 = arith.constant 0 : index
    %c0_6 = arith.constant 0 : index
    %30 = vector.load %arg4[%c0_5, %c0_6] : memref<128x1xf32, #tpu.memory_space<vmem>>, vector<128x1xf32>
    %cst_7 = arith.constant dense<0.000000e+00> : vector<16x1xf32>
    %31 = tpu.matmul %29, %30, %cst_7 {dimension_numbers = #tpu.dot_dimension_numbers<[1], [0], [0], [1], [0, 0, 1, 1], [], []>} : vector<16x128xf32>, vector<128x1xf32>, vector<16x1xf32> -> vector<16x1xf32>
    %c0_8 = arith.constant 0 : index
    %c0_9 = arith.constant 0 : index
    %32 = vector.load %arg5[%c0_8, %c0_9] : memref<1x1xf32, #tpu.memory_space<vmem>>, vector<1x1xf32>
    %33 = vector.broadcast %32 : vector<1x1xf32> to vector<16x1xf32>
    %34 = arith.addf %31, %33 : vector<16x1xf32>
    %cst_10 = arith.constant 0.000000e+00 : f32
    %35 = vector.broadcast %cst_10 : f32 to vector<16x1xf32>
    %36 = arith.subf %35, %34 : vector<16x1xf32>
    %37 = math.exp %36 : vector<16x1xf32>
    %cst_11 = arith.constant 1.000000e+00 : f32
    %38 = vector.broadcast %cst_11 : f32 to vector<16x1xf32>
    %39 = arith.addf %38, %37 : vector<16x1xf32>
    %cst_12 = arith.constant 1.000000e+00 : f32
    %40 = vector.broadcast %cst_12 : f32 to vector<16x1xf32>
    %41 = arith.divf %40, %39 : vector<16x1xf32>
    %cst_13 = arith.constant 1.000000e+00 : f32
    %42 = vector.broadcast %cst_13 : f32 to vector<16x1xf32>
    %43 = arith.subf %42, %41 : vector<16x1xf32>
    %c0_14 = arith.constant 0 : index
    %c0_15 = arith.constant 0 : index
    %44 = vector.load %arg6[%c0_14, %c0_15] : memref<16x2xf32, #tpu.memory_space<vmem>>, vector<16x1xf32>
    tpu.vector_store %arg6[%c0_14, %c0_15], %43 {strides = array<i32>} : memref<16x2xf32, #tpu.memory_space<vmem>>, vector<16x1xf32>,
    %c0_16 = arith.constant 0 : index
    %c1 = arith.constant 1 : index
    %45 = vector.load %arg6[%c0_16, %c1] : memref<16x2xf32, #tpu.memory_space<vmem>>, vector<16x1xf32>
    tpu.vector_store %arg6[%c0_16, %c1], %41 {strides = array<i32>} : memref<16x2xf32, #tpu.memory_space<vmem>>, vector<16x1xf32>,
    return
  }
  func.func @transform_0(%arg0: i32) -> (i32, i32) {
    %c0_i32 = arith.constant 0 : i32
    %c0_i32_0 = arith.constant 0 : i32
    return %arg0, %c0_i32 : i32, i32
  }
  func.func @transform_1(%arg0: i32) -> (i32, i32) {
    %c0_i32 = arith.constant 0 : i32
    %c0_i32_0 = arith.constant 0 : i32
    %c0_i32_1 = arith.constant 0 : i32
    return %c0_i32, %c0_i32_0 : i32, i32
  }
  func.func @transform_2(%arg0: i32) -> (i32, i32) {
    %c0_i32 = arith.constant 0 : i32
    %c0_i32_0 = arith.constant 0 : i32
    %c0_i32_1 = arith.constant 0 : i32
    return %c0_i32, %c0_i32_0 : i32, i32
  }
  func.func @transform_3(%arg0: i32) -> (i32, i32) {
    %c0_i32 = arith.constant 0 : i32
    %c0_i32_0 = arith.constant 0 : i32
    %c0_i32_1 = arith.constant 0 : i32
    return %c0_i32, %c0_i32_0 : i32, i32
  }
  func.func @transform_4(%arg0: i32) -> (i32, i32) {
    %c0_i32 = arith.constant 0 : i32
    %c0_i32_0 = arith.constant 0 : i32
    %c0_i32_1 = arith.constant 0 : i32
    return %c0_i32, %c0_i32_0 : i32, i32
  }
  func.func @transform_5(%arg0: i32) -> (i32, i32) {
    %c0_i32 = arith.constant 0 : i32
    %c0_i32_0 = arith.constant 0 : i32
    return %arg0, %c0_i32 : i32, i32
  }
}

</mosaic_0001>

<llo_original>
// kernel: tpu_custom_call.1
$region0: #{tpu_custom_call.1}
  #allocation0 [shape = 'u32[]', space=smem, size = 0x4, offset = 0x4, fixed_abs, tag = 'smem constant byte address 0x4 - core index']
  #allocation1 [shape = 'u32[72,128]{1,0:T(1,128)}', space=vmem, size = 0x9000, scoped, tag = 'internal scratch']
  #allocation2 [shape = 'f32[1,1]{1,0:T(1,128)S(1)}', space=vmem, size = 0x200, scoped, tag = 'scoped memory for tpu_custom_call.1']
  %s0 = inlined_call_operand.vmem [shape: f32[16,4], index: 0, kind: input, shape index: {}]
  %s1 = inlined_call_operand.vmem [shape: f32[4,128], index: 1, kind: input, shape index: {}]
  %s2 = inlined_call_operand.vmem [shape: f32[1,128], index: 2, kind: input, shape index: {}]
  %s3 = inlined_call_operand.vmem [shape: f32[128,1], index: 3, kind: input, shape index: {}]
  %s4 = inlined_call_operand.<no memory space> [shape: f32[1,1], index: 4, kind: input, shape index: {}]
  %s5 = inlined_call_operand.vmem [shape: f32[16,2], index: 5, kind: output, shape index: {}]
  %s6 = sld [smem:[#allocation0]]
  $region30: #{tpu_custom_call.1} parent=0
    _
  %s8 = ssub.s32 1, %s6
  %s9 = scalar_select 0, %s8, %s6
  %v10 = vstv %s4
  %11 = vst [vmem:[#allocation2] sm:$0x1] %v10
  // Predicated region
  $region2: #{tpu_custom_call.1} parent=0 // pred_check
    _
  $region3: #{tpu_custom_call.1} parent=0 // pred_check_branch
    %13 = sbr.rel (0) target = $region5
  $region4: #{tpu_custom_call.1} parent=0 // pred_region
    _
  $region5: #{tpu_custom_call.1} parent=0 // pred_fallthru
    _
  // Predicated region
  $region6: #{tpu_custom_call.1} parent=0 // pred_check
    _
  $region7: #{tpu_custom_call.1} parent=0 // pred_check_branch
    %15 = sbr.rel (0) target = $region9
  $region8: #{tpu_custom_call.1} parent=0 // pred_region
    _
  $region9: #{tpu_custom_call.1} parent=0 // pred_fallthru
    _
  // Predicated region
  $region10: #{tpu_custom_call.1} parent=0 // pred_check
    _
  $region11: #{tpu_custom_call.1} parent=0 // pred_check_branch
    %17 = sbr.rel (0) target = $region13
  $region12: #{tpu_custom_call.1} parent=0 // pred_region
    _
  $region13: #{tpu_custom_call.1} parent=0 // pred_fallthru
    _
  // Predicated region
  $region14: #{tpu_custom_call.1} parent=0 // pred_check
    _
  $region15: #{tpu_custom_call.1} parent=0 // pred_check_branch
    %19 = sbr.rel (0) target = $region17
  $region16: #{tpu_custom_call.1} parent=0 // pred_region
    _
  $region17: #{tpu_custom_call.1} parent=0 // pred_fallthru
    _
  // Predicated region
  $region18: #{tpu_custom_call.1} parent=0 // pred_check
    _
  $region19: #{tpu_custom_call.1} parent=0 // pred_check_branch
    %21 = sbr.rel (0) target = $region21
  $region20: #{tpu_custom_call.1} parent=0 // pred_region
    _
  $region21: #{tpu_custom_call.1} parent=0 // pred_fallthru
    _
  %v22 = vld [vmem:[%s0] sm:$0xff]
  %v23 = vld [vmem:[%s0 + $0x8] sm:$0xff]
  %v24 = vld [vmem:[%s1] sm:$0xf]
  %26 = vset.pattern.permute.xlu0 0
  %27 = vperm.xlu0 %26, %v22
  %v28 = vpop.permute.xlu0 %27
  %31 = vset.pattern.permute.xlu0 0
  %32 = vperm.xlu0 %31, %v23
  %v33 = vpop.permute.xlu0 %32
  %v35 = vperm.slane %v24, 0
  %v36 = vmul.f32 %v28, %v35
  %v37 = vmul.f32 %v33, %v35
  %38 = vset.pattern.permute.xlu0 1
  %39 = vperm.xlu0 %38, %v22
  %v40 = vpop.permute.xlu0 %39
  %42 = vset.pattern.permute.xlu0 1
  %43 = vperm.xlu0 %42, %v23
  %v44 = vpop.permute.xlu0 %43
  %v46 = vperm.slane %v24, 1
  %v47 = vmul.f32 %v40, %v46
  %v48 = vmul.f32 %v44, %v46
  %v49 = vadd.f32 %v36, %v47
  %v50 = vadd.f32 %v37, %v48
  %51 = vset.pattern.permute.xlu0 2
  %52 = vperm.xlu0 %51, %v22
  %v53 = vpop.permute.xlu0 %52
  %55 = vset.pattern.permute.xlu0 2
  %56 = vperm.xlu0 %55, %v23
  %v57 = vpop.permute.xlu0 %56
  %v59 = vperm.slane %v24, 2
  %v60 = vmul.f32 %v53, %v59
  %v61 = vmul.f32 %v57, %v59
  %v62 = vadd.f32 %v49, %v60
  %v63 = vadd.f32 %v50, %v61
  %64 = vset.pattern.permute.xlu0 3
  %65 = vperm.xlu0 %64, %v22
  %v66 = vpop.permute.xlu0 %65
  %68 = vset.pattern.permute.xlu0 3
  %69 = vperm.xlu0 %68, %v23
  %v70 = vpop.permute.xlu0 %69
  %v72 = vperm.slane %v24, 3
  %v73 = vmul.f32 %v66, %v72
  %v74 = vmul.f32 %v70, %v72
  %v75 = vadd.f32 %v62, %v73
  %v76 = vadd.f32 %v63, %v74
  %v77 = vld [vmem:[%s2] sm:$0x1]
  %v79 = vperm.slane %v77, 0
  %v81 = vadd.f32 %v75, %v79
  %v82 = vadd.f32 %v76, %v79
  %v83 = vmax.f32 %v81, 0.0
  %v84 = vmax.f32 %v82, 0.0
  %v85 = vld [vmem:[%s3] sm:$0xff]
  %v86 = vld [vmem:[%s3 + $0x8] sm:$0xff]
  %v87 = vld [vmem:[%s3 + $0x10] sm:$0xff]
  %v88 = vld [vmem:[%s3 + $0x18] sm:$0xff]
  %v89 = vld [vmem:[%s3 + $0x20] sm:$0xff]
  %v90 = vld [vmem:[%s3 + $0x28] sm:$0xff]
  %v91 = vld [vmem:[%s3 + $0x30] sm:$0xff]
  %v92 = vld [vmem:[%s3 + $0x38] sm:$0xff]
  %v93 = vld [vmem:[%s3 + $0x40] sm:$0xff]
  %v94 = vld [vmem:[%s3 + $0x48] sm:$0xff]
  %v95 = vld [vmem:[%s3 + $0x50] sm:$0xff]
  %v96 = vld [vmem:[%s3 + $0x58] sm:$0xff]
  %v97 = vld [vmem:[%s3 + $0x60] sm:$0xff]
  %v98 = vld [vmem:[%s3 + $0x68] sm:$0xff]
  %v99 = vld [vmem:[%s3 + $0x70] sm:$0xff]
  %v100 = vld [vmem:[%s3 + $0x78] sm:$0xff]
  %v101 = vld [vmem:[#allocation2] sm:$0x1]
  %v103 = vperm.slane %v101, 0
  %105 = vmatpush.msra.mxu0 %v100
  %106 = vmatpush.msra.mxu0 %v99
  %107 = vmatpush.msra.mxu0 %v98
  %108 = vmatpush.msra.mxu0 %v97
  %109 = vmatpush.msra.mxu0 %v96
  %110 = vmatpush.msra.mxu0 %v95
  %111 = vmatpush.msra.mxu0 %v94
  %112 = vmatpush.msra.mxu0 %v93
  %113 = vmatpush.msra.mxu0 %v92
  %114 = vmatpush.msra.mxu0 %v91
  %115 = vmatpush.msra.mxu0 %v90
  %116 = vmatpush.msra.mxu0 %v89
  %117 = vmatpush.msra.mxu0 %v88
  %118 = vmatpush.msra.mxu0 %v87
  %119 = vmatpush.msra.mxu0 %v86
  %120 = vmatpush.msra.mxu0 %v85
  %121 = vmatmul.f32.gmra.mxu0 %v83
  %v122 = vpop.f32.mrf.mxu0
  %v123 = vadd.f32 %v103, %v122
  %124 = vmatmul.f32.gmra.mxu0 %v84
  %v125 = vpop.f32.mrf.mxu0
  %v126 = vadd.f32 %v103, %v125
  %127 = vdwg.mxu0
  %v128 = vsub.f32 0.0, %v123
  %v129 = vsub.f32 0.0, %v126
  %v130 = vmul.f32 %v128, 1.442695
  %v131 = vpow.pop %v130
  %v132 = vmul.f32 %v129, 1.442695
  %v133 = vpow.pop %v132
  %v134 = vadd.f32 %v131, 1.0
  %v135 = vadd.f32 %v133, 1.0
  %v136 = vrcp.pop %v134
  %v137 = vmul.f32 %v134, %v136
  %v138 = vsub.f32 1.0, %v137
  %v139 = vmul.f32 %v136, %v138
  %v140 = vadd.f32 %v136, %v139
  %vm141 = vweird.f32 %v134
  %vm142 = vweird.f32 %v136
  %vm143 = vmor %vm141, %vm142
  %v144 = vsel %vm143, %v136, %v140
  %v145 = vand.u32 2147483647, %v134
  %vm146 = vcmp.eq.f32.partialorder %v145, 8.507059e+37
  %v147 = vand.u32 %v134, 2147483648
  %v148 = vor.u32 1.1754944e-38, %v147
  %v149 = vsel %vm146, %v148, %v144
  %v150 = vmul.f32 1.0, %v149
  %v151 = vrcp.pop %v135
  %v152 = vmul.f32 %v135, %v151
  %v153 = vsub.f32 1.0, %v152
  %v154 = vmul.f32 %v151, %v153
  %v155 = vadd.f32 %v151, %v154
  %vm156 = vweird.f32 %v135
  %vm157 = vweird.f32 %v151
  %vm158 = vmor %vm156, %vm157
  %v159 = vsel %vm158, %v151, %v155
  %v160 = vand.u32 2147483647, %v135
  %vm161 = vcmp.eq.f32.partialorder %v160, 8.507059e+37
  %v162 = vand.u32 %v135, 2147483648
  %v163 = vor.u32 1.1754944e-38, %v162
  %v164 = vsel %vm161, %v163, %v159
  %v165 = vmul.f32 1.0, %v164
  %v166 = vsub.f32 1.0, %v150
  %v167 = vsub.f32 1.0, %v165
  %vm168 = vcmask 7168
  %169 = vst.msk [vmem:[%s5] sm:$0xff] %vm168, %v166
  %170 = vst.msk [vmem:[%s5 + $0x8] sm:$0xff] %vm168, %v167
  %173 = vrot.lane.b32.xlu0 %v150, 1
  %v174 = vpop.permute.xlu0 %173
  %175 = vrot.lane.b32.xlu0 %v165, 1
  %v176 = vpop.permute.xlu0 %175
  %vm179 = vcmask 15368
  %180 = vst.msk [vmem:[%s5] sm:$0xff] %vm179, %v174
  %181 = vst.msk [vmem:[%s5 + $0x8] sm:$0xff] %vm179, %v176
  // Predicated region
  $region22: #{tpu_custom_call.1} parent=0 // pred_check
    _
  $region23: #{tpu_custom_call.1} parent=0 // pred_check_branch
    %183 = sbr.rel (0) target = $region25
  $region24: #{tpu_custom_call.1} parent=0 // pred_region
    _
  $region25: #{tpu_custom_call.1} parent=0 // pred_fallthru
    _
  // Predicated region
  $region26: #{tpu_custom_call.1} parent=0 // pred_check
    _
  $region27: #{tpu_custom_call.1} parent=0 // pred_check_branch
    %185 = sbr.rel (0) target = $region29
  $region28: #{tpu_custom_call.1} parent=0 // pred_region
    _
  $region29: #{tpu_custom_call.1} parent=0 // pred_fallthru
    _

</llo_original>
